<compile_context>
chip_gen: v7x
topology: tpu7x:2x2x1
jax: 0.10.0
libtpu: 0.0.40
codegen_flags: <defaults>
</compile_context>

<pallas_src>
import jax
import jax.numpy as jnp
from jax.experimental import pallas as pl
from jax.experimental.pallas import tpu as pltpu


def _lstm_whole_kernel(x_ref, h0_ref, c0_ref,
                       w_ih_ref, w_hh_ref, bias_ref,
                       w_fc1_ref, w_head_ref,
                       out_ref):
    # Shapes (all static):
    #   x_ref   : (T*Bp, F)  bf16, time-major, each timestep = Bp contiguous rows
    #   h0/c0   : (Bp, H)    f32
    #   w_ih    : (F, 4H) bf16,  w_hh : (H, 4H) bf16   (gate order i, f, o, g)
    #   bias    : (3, max(4H,64)) f32: row0 = LSTM bias, row1 = fc1, row2 = head
    #   w_fc1   : (H, 64) bf16,  w_head : (64, 2) bf16  (mu | logvar fused)
    #   out_ref : (Bp, 2) f32
    Bp, H = h0_ref.shape
    H4 = 4 * H
    T = x_ref.shape[0] // Bp

    b_lstm = bias_ref[0:1, 0:H4]          # (1, 4H)
    b_fc1 = bias_ref[1:2, 0:64]           # (1, 64)
    b_head = bias_ref[2:3, 0:2]           # (1, 2)

    # Hoisted input projection for all timesteps: one bf16 MXU matmul + bias.
    pre = (jnp.dot(x_ref[...], w_ih_ref[...], preferred_element_type=jnp.float32)
           + b_lstm)                                           # (T*Bp, 4H) f32

    w_hh = w_hh_ref[...]                                       # bf16, loaded once
    h = h0_ref[...]
    c = c0_ref[...]

    # Statically unrolled recurrence; only h @ W_hh is sequential.
    # Gate order along the 4H axis (after import-time reorder): i, f, o, g.
    for t in range(T):
        gates = pre[t * Bp:(t + 1) * Bp, :] + jnp.dot(
            h.astype(jnp.bfloat16), w_hh,
            preferred_element_type=jnp.float32)                # (Bp, 4H) f32
        # One full-width sigmoid on the EUP approx path (covers i/f/o lanes).
        sig = pl.reciprocal(1.0 + jnp.exp(-gates), approx=True)
        i_g = sig[:, 0 * H:1 * H]
        f_g = sig[:, 1 * H:2 * H]
        o_g = sig[:, 2 * H:3 * H]
        g_g = jnp.tanh(gates[:, 3 * H:4 * H])                  # H-wide tanh only
        c = f_g * c + i_g * g_g
        h = o_g * jnp.tanh(c)

    # Fused heads: z = tanh(fc1(h_T));  [mu | logvar] = z @ [w_mu | w_lv] + b.
    z = jnp.tanh(jnp.dot(h.astype(jnp.bfloat16), w_fc1_ref[...],
                         preferred_element_type=jnp.float32) + b_fc1)   # (Bp, 64)
    out_ref[...] = (jnp.dot(z.astype(jnp.bfloat16), w_head_ref[...],
                            preferred_element_type=jnp.float32)
                    + b_head)                                           # (Bp, 2)


@jax.jit
def lstm_whole_forward(x, h0, c0, kparams):
    """x: (B, T, F) f32;  h0, c0: (B, H) f32;  kparams from prepare_params.

    Returns (mu, logvar), each (B, 1) f32.
    """
    B, T, F = x.shape
    (w_ih, w_hh, bias_slab, w_fc1, w_head) = kparams

    # Pad batch up to a multiple of 8 (sublane / MXU-row granularity).
    Bp = ((B + 7) // 8) * 8
    pad = Bp - B
    x_p = jnp.pad(x, ((0, pad), (0, 0), (0, 0)))
    h0_p = jnp.pad(h0, ((0, pad), (0, 0)))
    c0_p = jnp.pad(c0, ((0, pad), (0, 0)))

    # Time-major + flatten so each timestep is a contiguous, sublane-aligned
    # group of Bp rows; cast to bf16 here so the MXU operand cast fuses into the
    # wrapper transpose and the DMA moves half the bytes.
    x_tm = jnp.swapaxes(x_p, 0, 1).reshape(T * Bp, F).astype(jnp.bfloat16)

    vmem = pl.BlockSpec(memory_space=pltpu.MemorySpace.VMEM)
    out = pl.pallas_call(
        _lstm_whole_kernel,
        out_shape=jax.ShapeDtypeStruct((Bp, 2), jnp.float32),
        in_specs=[vmem] * 8,
        out_specs=vmem,
    )(x_tm, h0_p, c0_p, w_ih, w_hh, bias_slab, w_fc1, w_head)

    mu = out[:B, 0:1]
    logvar = out[:B, 1:2]
    return mu, logvar


def prepare_params(params, n_hidden):
    """One-time (checkpoint-import-time) parameter packing for the kernel.

    * Reorders LSTM gate columns [i,f,g,o] -> [i,f,o,g].
    * Casts all matmul weights to bf16 (f32 accumulation happens in-kernel).
    * Fuses the mu / logvar heads into one (64, 2) matmul.
    * Packs all biases (kept f32) into a single (3, max(4H,64)) slab.
    """
    (w_ih, w_hh, b, w_fc1, b_fc1, w_mu, b_mu, w_lv, b_lv) = params
    H = n_hidden
    perm = jnp.concatenate([jnp.arange(0, 2 * H),        # i, f
                            jnp.arange(3 * H, 4 * H),    # o
                            jnp.arange(2 * H, 3 * H)])   # g
    w_ih_r = w_ih[:, perm].astype(jnp.bfloat16)
    w_hh_r = w_hh[:, perm].astype(jnp.bfloat16)
    b_r = b[:, perm]

    w_head = jnp.concatenate([w_mu, w_lv], axis=1).astype(jnp.bfloat16)   # (64, 2)
    b_head = jnp.concatenate([b_mu, b_lv], axis=1)                        # (1, 2)

    width = max(4 * H, 64, 2)
    pad_row = lambda v: jnp.pad(v, ((0, 0), (0, width - v.shape[1])))
    bias_slab = jnp.concatenate(
        [pad_row(b_r), pad_row(b_fc1), pad_row(b_head)], axis=0)          # (3, width)

    return (w_ih_r, w_hh_r, bias_slab, w_fc1.astype(jnp.bfloat16), w_head)


def _reference_forward(x, h0, c0, params):
    """Pure-JAX f32 reference matching PyTorch nn.LSTM semantics (gate order i,f,g,o)."""
    (w_ih, w_hh, b, w_fc1, b_fc1, w_mu, b_mu, w_lv, b_lv) = params
    H = h0.shape[-1]

    def step(carry, x_t):
        h, c = carry
        gates = x_t @ w_ih + h @ w_hh + b[0]
        i = jax.nn.sigmoid(gates[:, 0 * H:1 * H])
        f = jax.nn.sigmoid(gates[:, 1 * H:2 * H])
        g = jnp.tanh(gates[:, 2 * H:3 * H])
        o = jax.nn.sigmoid(gates[:, 3 * H:4 * H])
        c = f * c + i * g
        h = o * jnp.tanh(c)
        return (h, c), None

    (h, _), _ = jax.lax.scan(step, (h0, c0), jnp.swapaxes(x, 0, 1))
    z = jnp.tanh(h @ w_fc1 + b_fc1[0])
    return z @ w_mu + b_mu[0], z @ w_lv + b_lv[0]


def make_params(key, n_feature, n_hidden):
    """Deterministic synthetic parameters in PyTorch convention.

    Weights pre-transposed to (in_dim, out_dim), LSTM bias = b_ih + b_hh,
    gate column order i, f, g, o — the same invariant a checkpoint loader
    must enforce before calling prepare_params().
    """
    ks = jax.random.split(key, 9)
    s_lstm = 1.0 / jnp.sqrt(n_hidden)
    s_fc1 = 1.0 / jnp.sqrt(n_hidden)
    s_head = 1.0 / jnp.sqrt(64)
    u = lambda k, shape, s: jax.random.uniform(k, shape, jnp.float32, -s, s)
    w_ih = u(ks[0], (n_feature, 4 * n_hidden), s_lstm)     # W_ih^T
    w_hh = u(ks[1], (n_hidden, 4 * n_hidden), s_lstm)      # W_hh^T
    b = u(ks[2], (1, 4 * n_hidden), s_lstm)                # b_ih + b_hh combined
    w_fc1 = u(ks[3], (n_hidden, 64), s_fc1)
    b_fc1 = u(ks[4], (1, 64), s_fc1)
    w_mu = u(ks[5], (64, 1), s_head)
    b_mu = u(ks[6], (1, 1), s_head)
    w_lv = u(ks[7], (64, 1), s_head)
    b_lv = u(ks[8], (1, 1), s_head)
    return (w_ih, w_hh, b, w_fc1, b_fc1, w_mu, b_mu, w_lv, b_lv)


if __name__ == "__main__":
    # Small shapes consistent with the module's forward:
    #   x: (batch, n_window, n_feature), hidden/cell: (batch, n_hidden)
    n_batch, n_window, n_feature, n_hidden = 2, 8, 4, 32

    key = jax.random.PRNGKey(0)
    k_x, k_h, k_c, k_p = jax.random.split(key, 4)
    x = jax.random.normal(k_x, (n_batch, n_window, n_feature), jnp.float32)
    h0 = jax.random.normal(k_h, (n_batch, n_hidden), jnp.float32)
    c0 = jax.random.normal(k_c, (n_batch, n_hidden), jnp.float32)

    params = make_params(k_p, n_feature, n_hidden)        # PyTorch-convention
    kparams = prepare_params(params, n_hidden)            # kernel-ready packing

    mu, logvar = lstm_whole_forward(x, h0, c0, kparams)
    jax.block_until_ready((mu, logvar))

    mu_ref, lv_ref = _reference_forward(x, h0, c0, params)
    assert mu.shape == (n_batch, 1) and logvar.shape == (n_batch, 1)
    # bf16 MXU operands + approx reciprocal vs. an all-f32 reference: tolerance
    # loosened from 2e-3 to 2e-2 as anticipated by the perf review.
    assert jnp.allclose(mu, mu_ref, atol=2e-2, rtol=2e-2)
    assert jnp.allclose(logvar, lv_ref, atol=2e-2, rtol=2e-2)

    print("KERNEL_OK")
</pallas_src>

<mosaic_0001>
module attributes {stable_mosaic.version = 11 : i64} {
  func.func @_lstm_whole_kernel(%arg0: memref<64x4xbf16, #tpu.memory_space<vmem>>, %arg1: memref<8x32xf32, #tpu.memory_space<vmem>>, %arg2: memref<8x32xf32, #tpu.memory_space<vmem>>, %arg3: memref<4x128xbf16, #tpu.memory_space<vmem>>, %arg4: memref<32x128xbf16, #tpu.memory_space<vmem>>, %arg5: memref<3x128xf32, #tpu.memory_space<vmem>>, %arg6: memref<32x64xbf16, #tpu.memory_space<vmem>>, %arg7: memref<64x2xbf16, #tpu.memory_space<vmem>>, %arg8: memref<8x2xf32, #tpu.memory_space<vmem>>) attributes {dimension_semantics = [], scalar_prefetch = 0 : i64, scratch_operands = 0 : i64, tpu.core_type = #tpu.core_type<tc>} {
    %c0 = arith.constant 0 : index
    %c0_0 = arith.constant 0 : index
    %0 = vector.load %arg5[%c0, %c0_0] : memref<3x128xf32, #tpu.memory_space<vmem>>, vector<1x128xf32>
    %c1 = arith.constant 1 : index
    %c0_1 = arith.constant 0 : index
    %1 = vector.load %arg5[%c1, %c0_1] : memref<3x128xf32, #tpu.memory_space<vmem>>, vector<1x64xf32>
    %c2 = arith.constant 2 : index
    %c0_2 = arith.constant 0 : index
    %2 = vector.load %arg5[%c2, %c0_2] : memref<3x128xf32, #tpu.memory_space<vmem>>, vector<1x2xf32>
    %c0_3 = arith.constant 0 : index
    %c0_4 = arith.constant 0 : index
    %3 = vector.load %arg0[%c0_3, %c0_4] : memref<64x4xbf16, #tpu.memory_space<vmem>>, vector<64x4xbf16>
    %c0_5 = arith.constant 0 : index
    %c0_6 = arith.constant 0 : index
    %4 = vector.load %arg3[%c0_5, %c0_6] : memref<4x128xbf16, #tpu.memory_space<vmem>>, vector<4x128xbf16>
    %cst = arith.constant dense<0.000000e+00> : vector<64x128xf32>
    %5 = tpu.matmul %3, %4, %cst {dimension_numbers = #tpu.dot_dimension_numbers<[1], [0], [0], [1], [0, 0, 1, 1], [], []>} : vector<64x4xbf16>, vector<4x128xbf16>, vector<64x128xf32> -> vector<64x128xf32>
    %6 = vector.broadcast %0 : vector<1x128xf32> to vector<64x128xf32>
    %7 = arith.addf %5, %6 : vector<64x128xf32>
    %c0_7 = arith.constant 0 : index
    %c0_8 = arith.constant 0 : index
    %8 = vector.load %arg4[%c0_7, %c0_8] : memref<32x128xbf16, #tpu.memory_space<vmem>>, vector<32x128xbf16>
    %c0_9 = arith.constant 0 : index
    %c0_10 = arith.constant 0 : index
    %9 = vector.load %arg1[%c0_9, %c0_10] : memref<8x32xf32, #tpu.memory_space<vmem>>, vector<8x32xf32>
    %c0_11 = arith.constant 0 : index
    %c0_12 = arith.constant 0 : index
    %10 = vector.load %arg2[%c0_11, %c0_12] : memref<8x32xf32, #tpu.memory_space<vmem>>, vector<8x32xf32>
    %11 = vector.extract_strided_slice %7 {offsets = [0, 0], sizes = [8, 128], strides = [1, 1]} : vector<64x128xf32> to vector<8x128xf32>
    %12 = arith.truncf %9 : vector<8x32xf32> to vector<8x32xbf16>
    %cst_13 = arith.constant dense<0.000000e+00> : vector<8x128xf32>
    %13 = tpu.matmul %12, %8, %cst_13 {dimension_numbers = #tpu.dot_dimension_numbers<[1], [0], [0], [1], [0, 0, 1, 1], [], []>} : vector<8x32xbf16>, vector<32x128xbf16>, vector<8x128xf32> -> vector<8x128xf32>
    %14 = arith.addf %11, %13 : vector<8x128xf32>
    %cst_14 = arith.constant 0.000000e+00 : f32
    %15 = vector.broadcast %cst_14 : f32 to vector<8x128xf32>
    %16 = arith.subf %15, %14 : vector<8x128xf32>
    %17 = math.exp %16 : vector<8x128xf32>
    %cst_15 = arith.constant 1.000000e+00 : f32
    %18 = vector.broadcast %cst_15 : f32 to vector<8x128xf32>
    %19 = arith.addf %18, %17 : vector<8x128xf32>
    %20 = tpu.reciprocal %19 {approx = true} : vector<8x128xf32> -> vector<8x128xf32>
    %21 = vector.extract_strided_slice %20 {offsets = [0, 0], sizes = [8, 32], strides = [1, 1]} : vector<8x128xf32> to vector<8x32xf32>
    %22 = vector.extract_strided_slice %20 {offsets = [0, 32], sizes = [8, 32], strides = [1, 1]} : vector<8x128xf32> to vector<8x32xf32>
    %23 = vector.extract_strided_slice %20 {offsets = [0, 64], sizes = [8, 32], strides = [1, 1]} : vector<8x128xf32> to vector<8x32xf32>
    %24 = vector.extract_strided_slice %14 {offsets = [0, 96], sizes = [8, 32], strides = [1, 1]} : vector<8x128xf32> to vector<8x32xf32>
    %25 = math.tanh %24 : vector<8x32xf32>
    %26 = arith.mulf %22, %10 : vector<8x32xf32>
    %27 = arith.mulf %21, %25 : vector<8x32xf32>
    %28 = arith.addf %26, %27 : vector<8x32xf32>
    %29 = math.tanh %28 : vector<8x32xf32>
    %30 = arith.mulf %23, %29 : vector<8x32xf32>
    %31 = vector.extract_strided_slice %7 {offsets = [8, 0], sizes = [8, 128], strides = [1, 1]} : vector<64x128xf32> to vector<8x128xf32>
    %32 = arith.truncf %30 : vector<8x32xf32> to vector<8x32xbf16>
    %cst_16 = arith.constant dense<0.000000e+00> : vector<8x128xf32>
    %33 = tpu.matmul %32, %8, %cst_16 {dimension_numbers = #tpu.dot_dimension_numbers<[1], [0], [0], [1], [0, 0, 1, 1], [], []>} : vector<8x32xbf16>, vector<32x128xbf16>, vector<8x128xf32> -> vector<8x128xf32>
    %34 = arith.addf %31, %33 : vector<8x128xf32>
    %cst_17 = arith.constant 0.000000e+00 : f32
    %35 = vector.broadcast %cst_17 : f32 to vector<8x128xf32>
    %36 = arith.subf %35, %34 : vector<8x128xf32>
    %37 = math.exp %36 : vector<8x128xf32>
    %cst_18 = arith.constant 1.000000e+00 : f32
    %38 = vector.broadcast %cst_18 : f32 to vector<8x128xf32>
    %39 = arith.addf %38, %37 : vector<8x128xf32>
    %40 = tpu.reciprocal %39 {approx = true} : vector<8x128xf32> -> vector<8x128xf32>
    %41 = vector.extract_strided_slice %40 {offsets = [0, 0], sizes = [8, 32], strides = [1, 1]} : vector<8x128xf32> to vector<8x32xf32>
    %42 = vector.extract_strided_slice %40 {offsets = [0, 32], sizes = [8, 32], strides = [1, 1]} : vector<8x128xf32> to vector<8x32xf32>
    %43 = vector.extract_strided_slice %40 {offsets = [0, 64], sizes = [8, 32], strides = [1, 1]} : vector<8x128xf32> to vector<8x32xf32>
    %44 = vector.extract_strided_slice %34 {offsets = [0, 96], sizes = [8, 32], strides = [1, 1]} : vector<8x128xf32> to vector<8x32xf32>
    %45 = math.tanh %44 : vector<8x32xf32>
    %46 = arith.mulf %42, %28 : vector<8x32xf32>
    %47 = arith.mulf %41, %45 : vector<8x32xf32>
    %48 = arith.addf %46, %47 : vector<8x32xf32>
    %49 = math.tanh %48 : vector<8x32xf32>
    %50 = arith.mulf %43, %49 : vector<8x32xf32>
    %51 = vector.extract_strided_slice %7 {offsets = [16, 0], sizes = [8, 128], strides = [1, 1]} : vector<64x128xf32> to vector<8x128xf32>
    %52 = arith.truncf %50 : vector<8x32xf32> to vector<8x32xbf16>
    %cst_19 = arith.constant dense<0.000000e+00> : vector<8x128xf32>
    %53 = tpu.matmul %52, %8, %cst_19 {dimension_numbers = #tpu.dot_dimension_numbers<[1], [0], [0], [1], [0, 0, 1, 1], [], []>} : vector<8x32xbf16>, vector<32x128xbf16>, vector<8x128xf32> -> vector<8x128xf32>
    %54 = arith.addf %51, %53 : vector<8x128xf32>
    %cst_20 = arith.constant 0.000000e+00 : f32
    %55 = vector.broadcast %cst_20 : f32 to vector<8x128xf32>
    %56 = arith.subf %55, %54 : vector<8x128xf32>
    %57 = math.exp %56 : vector<8x128xf32>
    %cst_21 = arith.constant 1.000000e+00 : f32
    %58 = vector.broadcast %cst_21 : f32 to vector<8x128xf32>
    %59 = arith.addf %58, %57 : vector<8x128xf32>
    %60 = tpu.reciprocal %59 {approx = true} : vector<8x128xf32> -> vector<8x128xf32>
    %61 = vector.extract_strided_slice %60 {offsets = [0, 0], sizes = [8, 32], strides = [1, 1]} : vector<8x128xf32> to vector<8x32xf32>
    %62 = vector.extract_strided_slice %60 {offsets = [0, 32], sizes = [8, 32], strides = [1, 1]} : vector<8x128xf32> to vector<8x32xf32>
    %63 = vector.extract_strided_slice %60 {offsets = [0, 64], sizes = [8, 32], strides = [1, 1]} : vector<8x128xf32> to vector<8x32xf32>
    %64 = vector.extract_strided_slice %54 {offsets = [0, 96], sizes = [8, 32], strides = [1, 1]} : vector<8x128xf32> to vector<8x32xf32>
    %65 = math.tanh %64 : vector<8x32xf32>
    %66 = arith.mulf %62, %48 : vector<8x32xf32>
    %67 = arith.mulf %61, %65 : vector<8x32xf32>
    %68 = arith.addf %66, %67 : vector<8x32xf32>
    %69 = math.tanh %68 : vector<8x32xf32>
    %70 = arith.mulf %63, %69 : vector<8x32xf32>
    %71 = vector.extract_strided_slice %7 {offsets = [24, 0], sizes = [8, 128], strides = [1, 1]} : vector<64x128xf32> to vector<8x128xf32>
    %72 = arith.truncf %70 : vector<8x32xf32> to vector<8x32xbf16>
    %cst_22 = arith.constant dense<0.000000e+00> : vector<8x128xf32>
    %73 = tpu.matmul %72, %8, %cst_22 {dimension_numbers = #tpu.dot_dimension_numbers<[1], [0], [0], [1], [0, 0, 1, 1], [], []>} : vector<8x32xbf16>, vector<32x128xbf16>, vector<8x128xf32> -> vector<8x128xf32>
    %74 = arith.addf %71, %73 : vector<8x128xf32>
    %cst_23 = arith.constant 0.000000e+00 : f32
    %75 = vector.broadcast %cst_23 : f32 to vector<8x128xf32>
    %76 = arith.subf %75, %74 : vector<8x128xf32>
    %77 = math.exp %76 : vector<8x128xf32>
    %cst_24 = arith.constant 1.000000e+00 : f32
    %78 = vector.broadcast %cst_24 : f32 to vector<8x128xf32>
    %79 = arith.addf %78, %77 : vector<8x128xf32>
    %80 = tpu.reciprocal %79 {approx = true} : vector<8x128xf32> -> vector<8x128xf32>
    %81 = vector.extract_strided_slice %80 {offsets = [0, 0], sizes = [8, 32], strides = [1, 1]} : vector<8x128xf32> to vector<8x32xf32>
    %82 = vector.extract_strided_slice %80 {offsets = [0, 32], sizes = [8, 32], strides = [1, 1]} : vector<8x128xf32> to vector<8x32xf32>
    %83 = vector.extract_strided_slice %80 {offsets = [0, 64], sizes = [8, 32], strides = [1, 1]} : vector<8x128xf32> to vector<8x32xf32>
    %84 = vector.extract_strided_slice %74 {offsets = [0, 96], sizes = [8, 32], strides = [1, 1]} : vector<8x128xf32> to vector<8x32xf32>
    %85 = math.tanh %84 : vector<8x32xf32>
    %86 = arith.mulf %82, %68 : vector<8x32xf32>
    %87 = arith.mulf %81, %85 : vector<8x32xf32>
    %88 = arith.addf %86, %87 : vector<8x32xf32>
    %89 = math.tanh %88 : vector<8x32xf32>
    %90 = arith.mulf %83, %89 : vector<8x32xf32>
    %91 = vector.extract_strided_slice %7 {offsets = [32, 0], sizes = [8, 128], strides = [1, 1]} : vector<64x128xf32> to vector<8x128xf32>
    %92 = arith.truncf %90 : vector<8x32xf32> to vector<8x32xbf16>
    %cst_25 = arith.constant dense<0.000000e+00> : vector<8x128xf32>
    %93 = tpu.matmul %92, %8, %cst_25 {dimension_numbers = #tpu.dot_dimension_numbers<[1], [0], [0], [1], [0, 0, 1, 1], [], []>} : vector<8x32xbf16>, vector<32x128xbf16>, vector<8x128xf32> -> vector<8x128xf32>
    %94 = arith.addf %91, %93 : vector<8x128xf32>
    %cst_26 = arith.constant 0.000000e+00 : f32
    %95 = vector.broadcast %cst_26 : f32 to vector<8x128xf32>
    %96 = arith.subf %95, %94 : vector<8x128xf32>
    %97 = math.exp %96 : vector<8x128xf32>
    %cst_27 = arith.constant 1.000000e+00 : f32
    %98 = vector.broadcast %cst_27 : f32 to vector<8x128xf32>
    %99 = arith.addf %98, %97 : vector<8x128xf32>
    %100 = tpu.reciprocal %99 {approx = true} : vector<8x128xf32> -> vector<8x128xf32>
    %101 = vector.extract_strided_slice %100 {offsets = [0, 0], sizes = [8, 32], strides = [1, 1]} : vector<8x128xf32> to vector<8x32xf32>
    %102 = vector.extract_strided_slice %100 {offsets = [0, 32], sizes = [8, 32], strides = [1, 1]} : vector<8x128xf32> to vector<8x32xf32>
    %103 = vector.extract_strided_slice %100 {offsets = [0, 64], sizes = [8, 32], strides = [1, 1]} : vector<8x128xf32> to vector<8x32xf32>
    %104 = vector.extract_strided_slice %94 {offsets = [0, 96], sizes = [8, 32], strides = [1, 1]} : vector<8x128xf32> to vector<8x32xf32>
    %105 = math.tanh %104 : vector<8x32xf32>
    %106 = arith.mulf %102, %88 : vector<8x32xf32>
    %107 = arith.mulf %101, %105 : vector<8x32xf32>
    %108 = arith.addf %106, %107 : vector<8x32xf32>
    %109 = math.tanh %108 : vector<8x32xf32>
    %110 = arith.mulf %103, %109 : vector<8x32xf32>
    %111 = vector.extract_strided_slice %7 {offsets = [40, 0], sizes = [8, 128], strides = [1, 1]} : vector<64x128xf32> to vector<8x128xf32>
    %112 = arith.truncf %110 : vector<8x32xf32> to vector<8x32xbf16>
    %cst_28 = arith.constant dense<0.000000e+00> : vector<8x128xf32>
    %113 = tpu.matmul %112, %8, %cst_28 {dimension_numbers = #tpu.dot_dimension_numbers<[1], [0], [0], [1], [0, 0, 1, 1], [], []>} : vector<8x32xbf16>, vector<32x128xbf16>, vector<8x128xf32> -> vector<8x128xf32>
    %114 = arith.addf %111, %113 : vector<8x128xf32>
    %cst_29 = arith.constant 0.000000e+00 : f32
    %115 = vector.broadcast %cst_29 : f32 to vector<8x128xf32>
    %116 = arith.subf %115, %114 : vector<8x128xf32>
    %117 = math.exp %116 : vector<8x128xf32>
    %cst_30 = arith.constant 1.000000e+00 : f32
    %118 = vector.broadcast %cst_30 : f32 to vector<8x128xf32>
    %119 = arith.addf %118, %117 : vector<8x128xf32>
    %120 = tpu.reciprocal %119 {approx = true} : vector<8x128xf32> -> vector<8x128xf32>
    %121 = vector.extract_strided_slice %120 {offsets = [0, 0], sizes = [8, 32], strides = [1, 1]} : vector<8x128xf32> to vector<8x32xf32>
    %122 = vector.extract_strided_slice %120 {offsets = [0, 32], sizes = [8, 32], strides = [1, 1]} : vector<8x128xf32> to vector<8x32xf32>
    %123 = vector.extract_strided_slice %120 {offsets = [0, 64], sizes = [8, 32], strides = [1, 1]} : vector<8x128xf32> to vector<8x32xf32>
    %124 = vector.extract_strided_slice %114 {offsets = [0, 96], sizes = [8, 32], strides = [1, 1]} : vector<8x128xf32> to vector<8x32xf32>
    %125 = math.tanh %124 : vector<8x32xf32>
    %126 = arith.mulf %122, %108 : vector<8x32xf32>
    %127 = arith.mulf %121, %125 : vector<8x32xf32>
    %128 = arith.addf %126, %127 : vector<8x32xf32>
    %129 = math.tanh %128 : vector<8x32xf32>
    %130 = arith.mulf %123, %129 : vector<8x32xf32>
    %131 = vector.extract_strided_slice %7 {offsets = [48, 0], sizes = [8, 128], strides = [1, 1]} : vector<64x128xf32> to vector<8x128xf32>
    %132 = arith.truncf %130 : vector<8x32xf32> to vector<8x32xbf16>
    %cst_31 = arith.constant dense<0.000000e+00> : vector<8x128xf32>
    %133 = tpu.matmul %132, %8, %cst_31 {dimension_numbers = #tpu.dot_dimension_numbers<[1], [0], [0], [1], [0, 0, 1, 1], [], []>} : vector<8x32xbf16>, vector<32x128xbf16>, vector<8x128xf32> -> vector<8x128xf32>
    %134 = arith.addf %131, %133 : vector<8x128xf32>
    %cst_32 = arith.constant 0.000000e+00 : f32
    %135 = vector.broadcast %cst_32 : f32 to vector<8x128xf32>
    %136 = arith.subf %135, %134 : vector<8x128xf32>
    %137 = math.exp %136 : vector<8x128xf32>
    %cst_33 = arith.constant 1.000000e+00 : f32
    %138 = vector.broadcast %cst_33 : f32 to vector<8x128xf32>
    %139 = arith.addf %138, %137 : vector<8x128xf32>
    %140 = tpu.reciprocal %139 {approx = true} : vector<8x128xf32> -> vector<8x128xf32>
    %141 = vector.extract_strided_slice %140 {offsets = [0, 0], sizes = [8, 32], strides = [1, 1]} : vector<8x128xf32> to vector<8x32xf32>
    %142 = vector.extract_strided_slice %140 {offsets = [0, 32], sizes = [8, 32], strides = [1, 1]} : vector<8x128xf32> to vector<8x32xf32>
    %143 = vector.extract_strided_slice %140 {offsets = [0, 64], sizes = [8, 32], strides = [1, 1]} : vector<8x128xf32> to vector<8x32xf32>
    %144 = vector.extract_strided_slice %134 {offsets = [0, 96], sizes = [8, 32], strides = [1, 1]} : vector<8x128xf32> to vector<8x32xf32>
    %145 = math.tanh %144 : vector<8x32xf32>
    %146 = arith.mulf %142, %128 : vector<8x32xf32>
    %147 = arith.mulf %141, %145 : vector<8x32xf32>
    %148 = arith.addf %146, %147 : vector<8x32xf32>
    %149 = math.tanh %148 : vector<8x32xf32>
    %150 = arith.mulf %143, %149 : vector<8x32xf32>
    %151 = vector.extract_strided_slice %7 {offsets = [56, 0], sizes = [8, 128], strides = [1, 1]} : vector<64x128xf32> to vector<8x128xf32>
    %152 = arith.truncf %150 : vector<8x32xf32> to vector<8x32xbf16>
    %cst_34 = arith.constant dense<0.000000e+00> : vector<8x128xf32>
    %153 = tpu.matmul %152, %8, %cst_34 {dimension_numbers = #tpu.dot_dimension_numbers<[1], [0], [0], [1], [0, 0, 1, 1], [], []>} : vector<8x32xbf16>, vector<32x128xbf16>, vector<8x128xf32> -> vector<8x128xf32>
    %154 = arith.addf %151, %153 : vector<8x128xf32>
    %cst_35 = arith.constant 0.000000e+00 : f32
    %155 = vector.broadcast %cst_35 : f32 to vector<8x128xf32>
    %156 = arith.subf %155, %154 : vector<8x128xf32>
    %157 = math.exp %156 : vector<8x128xf32>
    %cst_36 = arith.constant 1.000000e+00 : f32
    %158 = vector.broadcast %cst_36 : f32 to vector<8x128xf32>
    %159 = arith.addf %158, %157 : vector<8x128xf32>
    %160 = tpu.reciprocal %159 {approx = true} : vector<8x128xf32> -> vector<8x128xf32>
    %161 = vector.extract_strided_slice %160 {offsets = [0, 0], sizes = [8, 32], strides = [1, 1]} : vector<8x128xf32> to vector<8x32xf32>
    %162 = vector.extract_strided_slice %160 {offsets = [0, 32], sizes = [8, 32], strides = [1, 1]} : vector<8x128xf32> to vector<8x32xf32>
    %163 = vector.extract_strided_slice %160 {offsets = [0, 64], sizes = [8, 32], strides = [1, 1]} : vector<8x128xf32> to vector<8x32xf32>
    %164 = vector.extract_strided_slice %154 {offsets = [0, 96], sizes = [8, 32], strides = [1, 1]} : vector<8x128xf32> to vector<8x32xf32>
    %165 = math.tanh %164 : vector<8x32xf32>
    %166 = arith.mulf %162, %148 : vector<8x32xf32>
    %167 = arith.mulf %161, %165 : vector<8x32xf32>
    %168 = arith.addf %166, %167 : vector<8x32xf32>
    %169 = math.tanh %168 : vector<8x32xf32>
    %170 = arith.mulf %163, %169 : vector<8x32xf32>
    %171 = arith.truncf %170 : vector<8x32xf32> to vector<8x32xbf16>
    %c0_37 = arith.constant 0 : index
    %c0_38 = arith.constant 0 : index
    %172 = vector.load %arg6[%c0_37, %c0_38] : memref<32x64xbf16, #tpu.memory_space<vmem>>, vector<32x64xbf16>
    %cst_39 = arith.constant dense<0.000000e+00> : vector<8x64xf32>
    %173 = tpu.matmul %171, %172, %cst_39 {dimension_numbers = #tpu.dot_dimension_numbers<[1], [0], [0], [1], [0, 0, 1, 1], [], []>} : vector<8x32xbf16>, vector<32x64xbf16>, vector<8x64xf32> -> vector<8x64xf32>
    %174 = vector.broadcast %1 : vector<1x64xf32> to vector<8x64xf32>
    %175 = arith.addf %173, %174 : vector<8x64xf32>
    %176 = math.tanh %175 : vector<8x64xf32>
    %177 = arith.truncf %176 : vector<8x64xf32> to vector<8x64xbf16>
    %c0_40 = arith.constant 0 : index
    %c0_41 = arith.constant 0 : index
    %178 = vector.load %arg7[%c0_40, %c0_41] : memref<64x2xbf16, #tpu.memory_space<vmem>>, vector<64x2xbf16>
    %cst_42 = arith.constant dense<0.000000e+00> : vector<8x2xf32>
    %179 = tpu.matmul %177, %178, %cst_42 {dimension_numbers = #tpu.dot_dimension_numbers<[1], [0], [0], [1], [0, 0, 1, 1], [], []>} : vector<8x64xbf16>, vector<64x2xbf16>, vector<8x2xf32> -> vector<8x2xf32>
    %180 = vector.broadcast %2 : vector<1x2xf32> to vector<8x2xf32>
    %181 = arith.addf %179, %180 : vector<8x2xf32>
    %c0_43 = arith.constant 0 : index
    %c0_44 = arith.constant 0 : index
    %182 = vector.load %arg8[%c0_43, %c0_44] : memref<8x2xf32, #tpu.memory_space<vmem>>, vector<8x2xf32>
    tpu.vector_store %arg8[%c0_43, %c0_44], %181 {strides = array<i32>} : memref<8x2xf32, #tpu.memory_space<vmem>>, vector<8x2xf32>,
    return
  }
}

</mosaic_0001>

<llo_original>
// kernel: lstm_whole_forward.1
$region0: #{lstm_whole_forward.1}
  #allocation0 [shape = 'u32[]', space=smem, size = 0x4, offset = 0x4, fixed_abs, tag = 'smem constant byte address 0x4 - core index']
  #allocation1 [shape = 'u32[144,128]{1,0:T(1,128)}', space=vmem, size = 0x12000, scoped, tag = 'internal scratch']
  %s0 = inlined_call_operand.vmem [shape: bf16[64,4], index: 0, kind: input, shape index: {}]
  %s1 = inlined_call_operand.vmem [shape: f32[8,32], index: 1, kind: input, shape index: {}]
  %s2 = inlined_call_operand.vmem [shape: f32[8,32], index: 2, kind: input, shape index: {}]
  %s3 = inlined_call_operand.vmem [shape: bf16[4,128], index: 3, kind: input, shape index: {}]
  %s4 = inlined_call_operand.vmem [shape: bf16[32,128], index: 4, kind: input, shape index: {}]
  %s5 = inlined_call_operand.vmem [shape: f32[3,128], index: 5, kind: input, shape index: {}]
  %s6 = inlined_call_operand.vmem [shape: bf16[32,64], index: 6, kind: input, shape index: {}]
  %s7 = inlined_call_operand.vmem [shape: bf16[64,2], index: 7, kind: input, shape index: {}]
  %s8 = inlined_call_operand.vmem [shape: f32[8,2], index: 8, kind: output, shape index: {}]
  %s9 = sld [smem:[#allocation0]]
  $region42: #{lstm_whole_forward.1} parent=0
    _
  %s11 = ssub.s32 1, %s9
  %s12 = scalar_select 0, %s11, %s9
  // Predicated region
  $region2: #{lstm_whole_forward.1} parent=0 // pred_check
    _
  $region3: #{lstm_whole_forward.1} parent=0 // pred_check_branch
    %14 = sbr.rel (0) target = $region5
  $region4: #{lstm_whole_forward.1} parent=0 // pred_region
    _
  $region5: #{lstm_whole_forward.1} parent=0 // pred_fallthru
    _
  // Predicated region
  $region6: #{lstm_whole_forward.1} parent=0 // pred_check
    _
  $region7: #{lstm_whole_forward.1} parent=0 // pred_check_branch
    %16 = sbr.rel (0) target = $region9
  $region8: #{lstm_whole_forward.1} parent=0 // pred_region
    _
  $region9: #{lstm_whole_forward.1} parent=0 // pred_fallthru
    _
  // Predicated region
  $region10: #{lstm_whole_forward.1} parent=0 // pred_check
    _
  $region11: #{lstm_whole_forward.1} parent=0 // pred_check_branch
    %18 = sbr.rel (0) target = $region13
  $region12: #{lstm_whole_forward.1} parent=0 // pred_region
    _
  $region13: #{lstm_whole_forward.1} parent=0 // pred_fallthru
    _
  // Predicated region
  $region14: #{lstm_whole_forward.1} parent=0 // pred_check
    _
  $region15: #{lstm_whole_forward.1} parent=0 // pred_check_branch
    %20 = sbr.rel (0) target = $region17
  $region16: #{lstm_whole_forward.1} parent=0 // pred_region
    _
  $region17: #{lstm_whole_forward.1} parent=0 // pred_fallthru
    _
  // Predicated region
  $region18: #{lstm_whole_forward.1} parent=0 // pred_check
    _
  $region19: #{lstm_whole_forward.1} parent=0 // pred_check_branch
    %22 = sbr.rel (0) target = $region21
  $region20: #{lstm_whole_forward.1} parent=0 // pred_region
    _
  $region21: #{lstm_whole_forward.1} parent=0 // pred_fallthru
    _
  // Predicated region
  $region22: #{lstm_whole_forward.1} parent=0 // pred_check
    _
  $region23: #{lstm_whole_forward.1} parent=0 // pred_check_branch
    %24 = sbr.rel (0) target = $region25
  $region24: #{lstm_whole_forward.1} parent=0 // pred_region
    _
  $region25: #{lstm_whole_forward.1} parent=0 // pred_fallthru
    _
  // Predicated region
  $region26: #{lstm_whole_forward.1} parent=0 // pred_check
    _
  $region27: #{lstm_whole_forward.1} parent=0 // pred_check_branch
    %26 = sbr.rel (0) target = $region29
  $region28: #{lstm_whole_forward.1} parent=0 // pred_region
    _
  $region29: #{lstm_whole_forward.1} parent=0 // pred_fallthru
    _
  // Predicated region
  $region30: #{lstm_whole_forward.1} parent=0 // pred_check
    _
  $region31: #{lstm_whole_forward.1} parent=0 // pred_check_branch
    %28 = sbr.rel (0) target = $region33
  $region32: #{lstm_whole_forward.1} parent=0 // pred_region
    _
  $region33: #{lstm_whole_forward.1} parent=0 // pred_fallthru
    _
  %v30 = vld [vmem:[%s5] sm:$0x1]
  %v31 = vld [vmem:[%s5 + $0x1] sm:$0x1]
  %v32 = vld [vmem:[%s5 + $0x2] sm:$0x1]
  %v33 = vld [vmem:[%s0] sm:$0xf]
  %v34 = vld [vmem:[%s0 + $0x4] sm:$0xf]
  %v35 = vld [vmem:[%s0 + $0x8] sm:$0xf]
  %v36 = vld [vmem:[%s0 + $0xc] sm:$0xf]
  %v37 = vld [vmem:[%s0 + $0x10] sm:$0xf]
  %v38 = vld [vmem:[%s0 + $0x14] sm:$0xf]
  %v39 = vld [vmem:[%s0 + $0x18] sm:$0xf]
  %v40 = vld [vmem:[%s0 + $0x1c] sm:$0xf]
  %v41 = vld [vmem:[%s3] sm:$0x3]
  %v42 = vlaneseq
  %v43 = vshrl.u32 %v42, 7
  %v44 = vsub.s32 0, %v43
  %v45 = vrot.slane %v30, %v44
  %v54 = vunpack.c.l.b16 %v33
  %v55 = vunpack.c.l.b16 %v34
  %v56 = vunpack.c.l.b16 %v35
  %v57 = vunpack.c.l.b16 %v36
  %v58 = vunpack.c.l.b16 %v37
  %v59 = vunpack.c.l.b16 %v38
  %v60 = vunpack.c.l.b16 %v39
  %v61 = vunpack.c.l.b16 %v40
  %v62 = vpack.c.b16 %v55, %v54
  %v63 = vpack.c.b16 %v57, %v56
  %v64 = vpack.c.b16 %v59, %v58
  %v65 = vpack.c.b16 %v61, %v60
  %vm66 = vcmask 31744
  %v68 = vsel %vm66, %v62, 0
  %v71 = vsel %vm66, %v63, 0
  %v74 = vsel %vm66, %v64, 0
  %v77 = vsel %vm66, %v65, 0
  %vm79 = vcmask 1041408
  %v81 = vsel %vm79, %v41, 0
  %83 = vmatprep.subr.bf16.mxu0 0
  %84 = vmatpush1.bf16.msra.mxu0 %v81
  %85 = vmatprep.subr.bf16.mxu0 0
  %86 = vmatpush1.bf16.msra.mxu0 0
  %87 = vmatprep.subr.bf16.mxu0 0
  %88 = vmatpush1.bf16.msra.mxu0 0
  %89 = vmatprep.subr.bf16.mxu0 0
  %90 = vmatpush1.bf16.msra.mxu0 0
  %91 = vmatprep.subr.bf16.mxu0 0
  %92 = vmatpush1.bf16.msra.mxu0 0
  %93 = vmatprep.subr.bf16.mxu0 0
  %94 = vmatpush1.bf16.msra.mxu0 0
  %95 = vmatprep.subr.bf16.mxu0 0
  %96 = vmatpush1.bf16.msra.mxu0 0
  %97 = vmatprep.subr.bf16.mxu0 0
  %98 = vmatpush1.bf16.msra.mxu0 0
  %99 = vmatprep.subr.bf16.mxu0 0
  %100 = vmatpush1.bf16.msra.mxu0 0
  %101 = vmatprep.subr.bf16.mxu0 0
  %102 = vmatpush1.bf16.msra.mxu0 0
  %103 = vmatprep.subr.bf16.mxu0 0
  %104 = vmatpush1.bf16.msra.mxu0 0
  %105 = vmatprep.subr.bf16.mxu0 0
  %106 = vmatpush1.bf16.msra.mxu0 0
  %107 = vmatprep.subr.bf16.mxu0 0
  %108 = vmatpush1.bf16.msra.mxu0 0
  %109 = vmatprep.subr.bf16.mxu0 0
  %110 = vmatpush1.bf16.msra.mxu0 0
  %111 = vmatprep.subr.bf16.mxu0 0
  %112 = vmatpush1.bf16.msra.mxu0 0
  %113 = vmatprep.subr.bf16.mxu0 0
  %114 = vmatpush1.bf16.msra.mxu0 0
  %115 = vmatprep.mubr.bf16.mxu0 0
  %116 = vmatmul.mubr.bf16.gmra.mrb[0].mxu0 %v68
  %v117 = vpop.f32.mrb[0].mxu0
  %v118 = vadd.f32 %v45, %v117
  %v119 = vpop.f32.mrb[0].mxu0
  %v120 = vpop.f32.mrb[0].mxu0
  %v121 = vadd.f32 %v45, %v120
  %v122 = vpop.f32.mrb[0].mxu0
  %123 = vmatprep.mubr.bf16.mxu0 0
  %124 = vmatmul.mubr.bf16.gmra.mrb[0].mxu0 %v71
  %v125 = vpop.f32.mrb[0].mxu0
  %v126 = vadd.f32 %v45, %v125
  %v127 = vpop.f32.mrb[0].mxu0
  %v128 = vpop.f32.mrb[0].mxu0
  %v129 = vadd.f32 %v45, %v128
  %v130 = vpop.f32.mrb[0].mxu0
  %131 = vmatprep.mubr.bf16.mxu0 0
  %132 = vmatmul.mubr.bf16.gmra.mrb[0].mxu0 %v74
  %v133 = vpop.f32.mrb[0].mxu0
  %v134 = vadd.f32 %v45, %v133
  %v135 = vpop.f32.mrb[0].mxu0
  %v136 = vpop.f32.mrb[0].mxu0
  %v137 = vadd.f32 %v45, %v136
  %v138 = vpop.f32.mrb[0].mxu0
  %139 = vmatprep.mubr.bf16.mxu0 0
  %140 = vmatmul.mubr.bf16.gmra.mrb[0].mxu0 %v77
  %v141 = vpop.f32.mrb[0].mxu0
  %v142 = vadd.f32 %v45, %v141
  %v143 = vpop.f32.mrb[0].mxu0
  %v144 = vpop.f32.mrb[0].mxu0
  %v145 = vadd.f32 %v45, %v144
  %v146 = vpop.f32.mrb[0].mxu0
  %147 = vdwg.mxu0
  %v148 = vld [vmem:[%s4] sm:$0xf]
  %v149 = vld [vmem:[%s4 + $0x4] sm:$0xf]
  %v150 = vld [vmem:[%s4 + $0x8] sm:$0xf]
  %v151 = vld [vmem:[%s4 + $0xc] sm:$0xf]
  %v152 = vld [vmem:[%s1] sm:$0xff]
  %v153 = vld [vmem:[%s2] sm:$0xff]
  %v154 = vpack.c.bf16 %v152, %v152
  %v159 = vunpack.c.l.b16 %v148
  %v160 = vunpack.c.l.b16 %v149
  %v161 = vunpack.c.l.b16 %v150
  %v162 = vunpack.c.l.b16 %v151
  %v163 = vpack.c.b16 %v160, %v159
  %v164 = vpack.c.b16 %v162, %v161
  %vm167 = vcmask 261120
  %v169 = vsel %vm167, %v154, 0
  %171 = vmatprep.subr.bf16.mxu0 0
  %172 = vmatpush1.bf16.msra.mxu0 %v163
  %173 = vmatprep.subr.bf16.mxu0 0
  %174 = vmatpush1.bf16.msra.mxu0 %v164
  %175 = vmatprep.subr.bf16.mxu0 0
  %176 = vmatpush1.bf16.msra.mxu0 0
  %177 = vmatprep.subr.bf16.mxu0 0
  %178 = vmatpush1.bf16.msra.mxu0 0
  %179 = vmatprep.subr.bf16.mxu0 0
  %180 = vmatpush1.bf16.msra.mxu0 0
  %181 = vmatprep.subr.bf16.mxu0 0
  %182 = vmatpush1.bf16.msra.mxu0 0
  %183 = vmatprep.subr.bf16.mxu0 0
  %184 = vmatpush1.bf16.msra.mxu0 0
  %185 = vmatprep.subr.bf16.mxu0 0
  %186 = vmatpush1.bf16.msra.mxu0 0
  %187 = vmatprep.subr.bf16.mxu0 0
  %188 = vmatpush1.bf16.msra.mxu0 0
  %189 = vmatprep.subr.bf16.mxu0 0
  %190 = vmatpush1.bf16.msra.mxu0 0
  %191 = vmatprep.subr.bf16.mxu0 0
  %192 = vmatpush1.bf16.msra.mxu0 0
  %193 = vmatprep.subr.bf16.mxu0 0
  %194 = vmatpush1.bf16.msra.mxu0 0
  %195 = vmatprep.subr.bf16.mxu0 0
  %196 = vmatpush1.bf16.msra.mxu0 0
  %197 = vmatprep.subr.bf16.mxu0 0
  %198 = vmatpush1.bf16.msra.mxu0 0
  %199 = vmatprep.subr.bf16.mxu0 0
  %200 = vmatpush1.bf16.msra.mxu0 0
  %201 = vmatprep.subr.bf16.mxu0 0
  %202 = vmatpush1.bf16.msra.mxu0 0
  %203 = vmatprep.mubr.bf16.mxu0 0
  %204 = vmatmul.mubr.bf16.gmra.mrb[0].mxu0 %v169
  %v205 = vpop.f32.mrb[0].mxu0
  %v206 = vadd.f32 0.0, %v205
  %v207 = vpop.f32.mrb[0].mxu0
  %v208 = vpop.f32.mrb[0].mxu0
  %v209 = vpop.f32.mrb[0].mxu0
  %210 = vdwg.mxu0
  %v211 = vadd.f32 %v118, %v206
  %v212 = vsub.f32 0.0, %v211
  %v213 = vmul.f32 %v212, 1.442695
  %v214 = vpow.pop %v213
  %v215 = vadd.f32 %v214, 1.0
  %v216 = vrcp.pop %v215
  %v217 = vtanh.pop %v211
  %219 = vrot.lane.b32.xlu0 %v153, 32
  %v220 = vpop.permute.xlu0 %219
  %v222 = vmul.f32 %v216, %v220
  %224 = vrot.lane.b32.xlu0 %v217, 32
  %v225 = vpop.permute.xlu0 %224
  %v227 = vmul.f32 %v216, %v225
  %229 = vrot.lane.b32.xlu0 %v227, 32
  %v230 = vpop.permute.xlu0 %229
  %v232 = vadd.f32 %v222, %v230
  %v233 = vtanh.pop %v232
  %235 = vrot.lane.b32.xlu0 %v233, 32
  %v236 = vpop.permute.xlu0 %235
  %v238 = vmul.f32 %v216, %v236
  %v239 = vpack.c.bf16 %v238, %v238
  %241 = vrot.lane.b32.xlu0 %v239, 64
  %v242 = vpop.permute.xlu0 %241
  %v244 = vsel %vm167, %v242, 0
  %246 = vmatprep.subr.bf16.mxu0 0
  %247 = vmatpush1.bf16.msra.mxu0 %v163
  %248 = vmatprep.subr.bf16.mxu0 0
  %249 = vmatpush1.bf16.msra.mxu0 %v164
  %250 = vmatprep.subr.bf16.mxu0 0
  %251 = vmatpush1.bf16.msra.mxu0 0
  %252 = vmatprep.subr.bf16.mxu0 0
  %253 = vmatpush1.bf16.msra.mxu0 0
  %254 = vmatprep.subr.bf16.mxu0 0
  %255 = vmatpush1.bf16.msra.mxu0 0
  %256 = vmatprep.subr.bf16.mxu0 0
  %257 = vmatpush1.bf16.msra.mxu0 0
  %258 = vmatprep.subr.bf16.mxu0 0
  %259 = vmatpush1.bf16.msra.mxu0 0
  %260 = vmatprep.subr.bf16.mxu0 0
  %261 = vmatpush1.bf16.msra.mxu0 0
  %262 = vmatprep.subr.bf16.mxu0 0
  %263 = vmatpush1.bf16.msra.mxu0 0
  %264 = vmatprep.subr.bf16.mxu0 0
  %265 = vmatpush1.bf16.msra.mxu0 0
  %266 = vmatprep.subr.bf16.mxu0 0
  %267 = vmatpush1.bf16.msra.mxu0 0
  %268 = vmatprep.subr.bf16.mxu0 0
  %269 = vmatpush1.bf16.msra.mxu0 0
  %270 = vmatprep.subr.bf16.mxu0 0
  %271 = vmatpush1.bf16.msra.mxu0 0
  %272 = vmatprep.subr.bf16.mxu0 0
  %273 = vmatpush1.bf16.msra.mxu0 0
  %274 = vmatprep.subr.bf16.mxu0 0
  %275 = vmatpush1.bf16.msra.mxu0 0
  %276 = vmatprep.subr.bf16.mxu0 0
  %277 = vmatpush1.bf16.msra.mxu0 0
  %278 = vmatprep.mubr.bf16.mxu0 0
  %279 = vmatmul.mubr.bf16.gmra.mrb[0].mxu0 %v244
  %v280 = vpop.f32.mrb[0].mxu0
  %v281 = vadd.f32 0.0, %v280
  %v282 = vpop.f32.mrb[0].mxu0
  %v283 = vpop.f32.mrb[0].mxu0
  %v284 = vpop.f32.mrb[0].mxu0
  %285 = vdwg.mxu0
  %v286 = vadd.f32 %v121, %v281
  %v287 = vsub.f32 0.0, %v286
  %v288 = vmul.f32 %v287, 1.442695
  %v289 = vpow.pop %v288
  %v290 = vadd.f32 %v289, 1.0
  %v291 = vrcp.pop %v290
  %v292 = vtanh.pop %v286
  %v293 = vmul.f32 %v291, %v232
  %295 = vrot.lane.b32.xlu0 %v292, 32
  %v296 = vpop.permute.xlu0 %295
  %v298 = vmul.f32 %v291, %v296
  %300 = vrot.lane.b32.xlu0 %v298, 32
  %v301 = vpop.permute.xlu0 %300
  %v303 = vadd.f32 %v293, %v301
  %v304 = vtanh.pop %v303
  %306 = vrot.lane.b32.xlu0 %v304, 32
  %v307 = vpop.permute.xlu0 %306
  %v309 = vmul.f32 %v291, %v307
  %v310 = vpack.c.bf16 %v309, %v309
  %312 = vrot.lane.b32.xlu0 %v310, 64
  %v313 = vpop.permute.xlu0 %312
  %v315 = vsel %vm167, %v313, 0
  %317 = vmatprep.subr.bf16.mxu0 0
  %318 = vmatpush1.bf16.msra.mxu0 %v163
  %319 = vmatprep.subr.bf16.mxu0 0
  %320 = vmatpush1.bf16.msra.mxu0 %v164
  %321 = vmatprep.subr.bf16.mxu0 0
  %322 = vmatpush1.bf16.msra.mxu0 0
  %323 = vmatprep.subr.bf16.mxu0 0
  %324 = vmatpush1.bf16.msra.mxu0 0
  %325 = vmatprep.subr.bf16.mxu0 0
  %326 = vmatpush1.bf16.msra.mxu0 0
  %327 = vmatprep.subr.bf16.mxu0 0
  %328 = vmatpush1.bf16.msra.mxu0 0
  %329 = vmatprep.subr.bf16.mxu0 0
  %330 = vmatpush1.bf16.msra.mxu0 0
  %331 = vmatprep.subr.bf16.mxu0 0
  %332 = vmatpush1.bf16.msra.mxu0 0
  %333 = vmatprep.subr.bf16.mxu0 0
  %334 = vmatpush1.bf16.msra.mxu0 0
  %335 = vmatprep.subr.bf16.mxu0 0
  %336 = vmatpush1.bf16.msra.mxu0 0
  %337 = vmatprep.subr.bf16.mxu0 0
  %338 = vmatpush1.bf16.msra.mxu0 0
  %339 = vmatprep.subr.bf16.mxu0 0
  %340 = vmatpush1.bf16.msra.mxu0 0
  %341 = vmatprep.subr.bf16.mxu0 0
  %342 = vmatpush1.bf16.msra.mxu0 0
  %343 = vmatprep.subr.bf16.mxu0 0
  %344 = vmatpush1.bf16.msra.mxu0 0
  %345 = vmatprep.subr.bf16.mxu0 0
  %346 = vmatpush1.bf16.msra.mxu0 0
  %347 = vmatprep.subr.bf16.mxu0 0
  %348 = vmatpush1.bf16.msra.mxu0 0
  %349 = vmatprep.mubr.bf16.mxu0 0
  %350 = vmatmul.mubr.bf16.gmra.mrb[0].mxu0 %v315
  %v351 = vpop.f32.mrb[0].mxu0
  %v352 = vadd.f32 0.0, %v351
  %v353 = vpop.f32.mrb[0].mxu0
  %v354 = vpop.f32.mrb[0].mxu0
  %v355 = vpop.f32.mrb[0].mxu0
  %356 = vdwg.mxu0
  %v357 = vadd.f32 %v126, %v352
  %v358 = vsub.f32 0.0, %v357
  %v359 = vmul.f32 %v358, 1.442695
  %v360 = vpow.pop %v359
  %v361 = vadd.f32 %v360, 1.0
  %v362 = vrcp.pop %v361
  %v363 = vtanh.pop %v357
  %v364 = vmul.f32 %v362, %v303
  %366 = vrot.lane.b32.xlu0 %v363, 32
  %v367 = vpop.permute.xlu0 %366
  %v369 = vmul.f32 %v362, %v367
  %371 = vrot.lane.b32.xlu0 %v369, 32
  %v372 = vpop.permute.xlu0 %371
  %v374 = vadd.f32 %v364, %v372
  %v375 = vtanh.pop %v374
  %377 = vrot.lane.b32.xlu0 %v375, 32
  %v378 = vpop.permute.xlu0 %377
  %v380 = vmul.f32 %v362, %v378
  %v381 = vpack.c.bf16 %v380, %v380
  %383 = vrot.lane.b32.xlu0 %v381, 64
  %v384 = vpop.permute.xlu0 %383
  %v386 = vsel %vm167, %v384, 0
  %388 = vmatprep.subr.bf16.mxu0 0
  %389 = vmatpush1.bf16.msra.mxu0 %v163
  %390 = vmatprep.subr.bf16.mxu0 0
  %391 = vmatpush1.bf16.msra.mxu0 %v164
  %392 = vmatprep.subr.bf16.mxu0 0
  %393 = vmatpush1.bf16.msra.mxu0 0
  %394 = vmatprep.subr.bf16.mxu0 0
  %395 = vmatpush1.bf16.msra.mxu0 0
  %396 = vmatprep.subr.bf16.mxu0 0
  %397 = vmatpush1.bf16.msra.mxu0 0
  %398 = vmatprep.subr.bf16.mxu0 0
  %399 = vmatpush1.bf16.msra.mxu0 0
  %400 = vmatprep.subr.bf16.mxu0 0
  %401 = vmatpush1.bf16.msra.mxu0 0
  %402 = vmatprep.subr.bf16.mxu0 0
  %403 = vmatpush1.bf16.msra.mxu0 0
  %404 = vmatprep.subr.bf16.mxu0 0
  %405 = vmatpush1.bf16.msra.mxu0 0
  %406 = vmatprep.subr.bf16.mxu0 0
  %407 = vmatpush1.bf16.msra.mxu0 0
  %408 = vmatprep.subr.bf16.mxu0 0
  %409 = vmatpush1.bf16.msra.mxu0 0
  %410 = vmatprep.subr.bf16.mxu0 0
  %411 = vmatpush1.bf16.msra.mxu0 0
  %412 = vmatprep.subr.bf16.mxu0 0
  %413 = vmatpush1.bf16.msra.mxu0 0
  %414 = vmatprep.subr.bf16.mxu0 0
  %415 = vmatpush1.bf16.msra.mxu0 0
  %416 = vmatprep.subr.bf16.mxu0 0
  %417 = vmatpush1.bf16.msra.mxu0 0
  %418 = vmatprep.subr.bf16.mxu0 0
  %419 = vmatpush1.bf16.msra.mxu0 0
  %420 = vmatprep.mubr.bf16.mxu0 0
  %421 = vmatmul.mubr.bf16.gmra.mrb[0].mxu0 %v386
  %v422 = vpop.f32.mrb[0].mxu0
  %v423 = vadd.f32 0.0, %v422
  %v424 = vpop.f32.mrb[0].mxu0
  %v425 = vpop.f32.mrb[0].mxu0
  %v426 = vpop.f32.mrb[0].mxu0
  %427 = vdwg.mxu0
  %v428 = vadd.f32 %v129, %v423
  %v429 = vsub.f32 0.0, %v428
  %v430 = vmul.f32 %v429, 1.442695
  %v431 = vpow.pop %v430
  %v432 = vadd.f32 %v431, 1.0
  %v433 = vrcp.pop %v432
  %v434 = vtanh.pop %v428
  %v435 = vmul.f32 %v433, %v374
  %437 = vrot.lane.b32.xlu0 %v434, 32
  %v438 = vpop.permute.xlu0 %437
  %v440 = vmul.f32 %v433, %v438
  %442 = vrot.lane.b32.xlu0 %v440, 32
  %v443 = vpop.permute.xlu0 %442
  %v445 = vadd.f32 %v435, %v443
  %v446 = vtanh.pop %v445
  %448 = vrot.lane.b32.xlu0 %v446, 32
  %v449 = vpop.permute.xlu0 %448
  %v451 = vmul.f32 %v433, %v449
  %v452 = vpack.c.bf16 %v451, %v451
  %454 = vrot.lane.b32.xlu0 %v452, 64
  %v455 = vpop.permute.xlu0 %454
  %v457 = vsel %vm167, %v455, 0
  %459 = vmatprep.subr.bf16.mxu0 0
  %460 = vmatpush1.bf16.msra.mxu0 %v163
  %461 = vmatprep.subr.bf16.mxu0 0
  %462 = vmatpush1.bf16.msra.mxu0 %v164
  %463 = vmatprep.subr.bf16.mxu0 0
  %464 = vmatpush1.bf16.msra.mxu0 0
  %465 = vmatprep.subr.bf16.mxu0 0
  %466 = vmatpush1.bf16.msra.mxu0 0
  %467 = vmatprep.subr.bf16.mxu0 0
  %468 = vmatpush1.bf16.msra.mxu0 0
  %469 = vmatprep.subr.bf16.mxu0 0
  %470 = vmatpush1.bf16.msra.mxu0 0
  %471 = vmatprep.subr.bf16.mxu0 0
  %472 = vmatpush1.bf16.msra.mxu0 0
  %473 = vmatprep.subr.bf16.mxu0 0
  %474 = vmatpush1.bf16.msra.mxu0 0
  %475 = vmatprep.subr.bf16.mxu0 0
  %476 = vmatpush1.bf16.msra.mxu0 0
  %477 = vmatprep.subr.bf16.mxu0 0
  %478 = vmatpush1.bf16.msra.mxu0 0
  %479 = vmatprep.subr.bf16.mxu0 0
  %480 = vmatpush1.bf16.msra.mxu0 0
  %481 = vmatprep.subr.bf16.mxu0 0
  %482 = vmatpush1.bf16.msra.mxu0 0
  %483 = vmatprep.subr.bf16.mxu0 0
  %484 = vmatpush1.bf16.msra.mxu0 0
  %485 = vmatprep.subr.bf16.mxu0 0
  %486 = vmatpush1.bf16.msra.mxu0 0
  %487 = vmatprep.subr.bf16.mxu0 0
  %488 = vmatpush1.bf16.msra.mxu0 0
  %489 = vmatprep.subr.bf16.mxu0 0
  %490 = vmatpush1.bf16.msra.mxu0 0
  %491 = vmatprep.mubr.bf16.mxu0 0
  %492 = vmatmul.mubr.bf16.gmra.mrb[0].mxu0 %v457
  %v493 = vpop.f32.mrb[0].mxu0
  %v494 = vadd.f32 0.0, %v493
  %v495 = vpop.f32.mrb[0].mxu0
  %v496 = vpop.f32.mrb[0].mxu0
  %v497 = vpop.f32.mrb[0].mxu0
  %498 = vdwg.mxu0
  %v499 = vadd.f32 %v134, %v494
  %v500 = vsub.f32 0.0, %v499
  %v501 = vmul.f32 %v500, 1.442695
  %v502 = vpow.pop %v501
  %v503 = vadd.f32 %v502, 1.0
  %v504 = vrcp.pop %v503
  %v505 = vtanh.pop %v499
  %v506 = vmul.f32 %v504, %v445
  %508 = vrot.lane.b32.xlu0 %v505, 32
  %v509 = vpop.permute.xlu0 %508
  %v511 = vmul.f32 %v504, %v509
  %513 = vrot.lane.b32.xlu0 %v511, 32
  %v514 = vpop.permute.xlu0 %513
  %v516 = vadd.f32 %v506, %v514
  %v517 = vtanh.pop %v516
  %519 = vrot.lane.b32.xlu0 %v517, 32
  %v520 = vpop.permute.xlu0 %519
  %v522 = vmul.f32 %v504, %v520
  %v523 = vpack.c.bf16 %v522, %v522
  %525 = vrot.lane.b32.xlu0 %v523, 64
  %v526 = vpop.permute.xlu0 %525
  %v528 = vsel %vm167, %v526, 0
  %530 = vmatprep.subr.bf16.mxu0 0
  %531 = vmatpush1.bf16.msra.mxu0 %v163
  %532 = vmatprep.subr.bf16.mxu0 0
  %533 = vmatpush1.bf16.msra.mxu0 %v164
  %534 = vmatprep.subr.bf16.mxu0 0
  %535 = vmatpush1.bf16.msra.mxu0 0
  %536 = vmatprep.subr.bf16.mxu0 0
  %537 = vmatpush1.bf16.msra.mxu0 0
  %538 = vmatprep.subr.bf16.mxu0 0
  %539 = vmatpush1.bf16.msra.mxu0 0
  %540 = vmatprep.subr.bf16.mxu0 0
  %541 = vmatpush1.bf16.msra.mxu0 0
  %542 = vmatprep.subr.bf16.mxu0 0
  %543 = vmatpush1.bf16.msra.mxu0 0
  %544 = vmatprep.subr.bf16.mxu0 0
  %545 = vmatpush1.bf16.msra.mxu0 0
  %546 = vmatprep.subr.bf16.mxu0 0
  %547 = vmatpush1.bf16.msra.mxu0 0
  %548 = vmatprep.subr.bf16.mxu0 0
  %549 = vmatpush1.bf16.msra.mxu0 0
  %550 = vmatprep.subr.bf16.mxu0 0
  %551 = vmatpush1.bf16.msra.mxu0 0
  %552 = vmatprep.subr.bf16.mxu0 0
  %553 = vmatpush1.bf16.msra.mxu0 0
  %554 = vmatprep.subr.bf16.mxu0 0
  %555 = vmatpush1.bf16.msra.mxu0 0
  %556 = vmatprep.subr.bf16.mxu0 0
  %557 = vmatpush1.bf16.msra.mxu0 0
  %558 = vmatprep.subr.bf16.mxu0 0
  %559 = vmatpush1.bf16.msra.mxu0 0
  %560 = vmatprep.subr.bf16.mxu0 0
  %561 = vmatpush1.bf16.msra.mxu0 0
  %562 = vmatprep.mubr.bf16.mxu0 0
  %563 = vmatmul.mubr.bf16.gmra.mrb[0].mxu0 %v528
  %v564 = vpop.f32.mrb[0].mxu0
  %v565 = vadd.f32 0.0, %v564
  %v566 = vpop.f32.mrb[0].mxu0
  %v567 = vpop.f32.mrb[0].mxu0
  %v568 = vpop.f32.mrb[0].mxu0
  %569 = vdwg.mxu0
  %v570 = vadd.f32 %v137, %v565
  %v571 = vsub.f32 0.0, %v570
  %v572 = vmul.f32 %v571, 1.442695
  %v573 = vpow.pop %v572
  %v574 = vadd.f32 %v573, 1.0
  %v575 = vrcp.pop %v574
  %v576 = vtanh.pop %v570
  %v577 = vmul.f32 %v575, %v516
  %579 = vrot.lane.b32.xlu0 %v576, 32
  %v580 = vpop.permute.xlu0 %579
  %v582 = vmul.f32 %v575, %v580
  %584 = vrot.lane.b32.xlu0 %v582, 32
  %v585 = vpop.permute.xlu0 %584
  %v587 = vadd.f32 %v577, %v585
  %v588 = vtanh.pop %v587
  %590 = vrot.lane.b32.xlu0 %v588, 32
  %v591 = vpop.permute.xlu0 %590
  %v593 = vmul.f32 %v575, %v591
  %v594 = vpack.c.bf16 %v593, %v593
  %596 = vrot.lane.b32.xlu0 %v594, 64
  %v597 = vpop.permute.xlu0 %596
  %v599 = vsel %vm167, %v597, 0
  %601 = vmatprep.subr.bf16.mxu0 0
  %602 = vmatpush1.bf16.msra.mxu0 %v163
  %603 = vmatprep.subr.bf16.mxu0 0
  %604 = vmatpush1.bf16.msra.mxu0 %v164
  %605 = vmatprep.subr.bf16.mxu0 0
  %606 = vmatpush1.bf16.msra.mxu0 0
  %607 = vmatprep.subr.bf16.mxu0 0
  %608 = vmatpush1.bf16.msra.mxu0 0
  %609 = vmatprep.subr.bf16.mxu0 0
  %610 = vmatpush1.bf16.msra.mxu0 0
  %611 = vmatprep.subr.bf16.mxu0 0
  %612 = vmatpush1.bf16.msra.mxu0 0
  %613 = vmatprep.subr.bf16.mxu0 0
  %614 = vmatpush1.bf16.msra.mxu0 0
  %615 = vmatprep.subr.bf16.mxu0 0
  %616 = vmatpush1.bf16.msra.mxu0 0
  %617 = vmatprep.subr.bf16.mxu0 0
  %618 = vmatpush1.bf16.msra.mxu0 0
  %619 = vmatprep.subr.bf16.mxu0 0
  %620 = vmatpush1.bf16.msra.mxu0 0
  %621 = vmatprep.subr.bf16.mxu0 0
  %622 = vmatpush1.bf16.msra.mxu0 0
  %623 = vmatprep.subr.bf16.mxu0 0
  %624 = vmatpush1.bf16.msra.mxu0 0
  %625 = vmatprep.subr.bf16.mxu0 0
  %626 = vmatpush1.bf16.msra.mxu0 0
  %627 = vmatprep.subr.bf16.mxu0 0
  %628 = vmatpush1.bf16.msra.mxu0 0
  %629 = vmatprep.subr.bf16.mxu0 0
  %630 = vmatpush1.bf16.msra.mxu0 0
  %631 = vmatprep.subr.bf16.mxu0 0
  %632 = vmatpush1.bf16.msra.mxu0 0
  %633 = vmatprep.mubr.bf16.mxu0 0
  %634 = vmatmul.mubr.bf16.gmra.mrb[0].mxu0 %v599
  %v635 = vpop.f32.mrb[0].mxu0
  %v636 = vadd.f32 0.0, %v635
  %v637 = vpop.f32.mrb[0].mxu0
  %v638 = vpop.f32.mrb[0].mxu0
  %v639 = vpop.f32.mrb[0].mxu0
  %640 = vdwg.mxu0
  %v641 = vadd.f32 %v142, %v636
  %v642 = vsub.f32 0.0, %v641
  %v643 = vmul.f32 %v642, 1.442695
  %v644 = vpow.pop %v643
  %v645 = vadd.f32 %v644, 1.0
  %v646 = vrcp.pop %v645
  %v647 = vtanh.pop %v641
  %v648 = vmul.f32 %v646, %v587
  %650 = vrot.lane.b32.xlu0 %v647, 32
  %v651 = vpop.permute.xlu0 %650
  %v653 = vmul.f32 %v646, %v651
  %655 = vrot.lane.b32.xlu0 %v653, 32
  %v656 = vpop.permute.xlu0 %655
  %v658 = vadd.f32 %v648, %v656
  %v659 = vtanh.pop %v658
  %661 = vrot.lane.b32.xlu0 %v659, 32
  %v662 = vpop.permute.xlu0 %661
  %v664 = vmul.f32 %v646, %v662
  %v665 = vpack.c.bf16 %v664, %v664
  %667 = vrot.lane.b32.xlu0 %v665, 64
  %v668 = vpop.permute.xlu0 %667
  %v670 = vsel %vm167, %v668, 0
  %672 = vmatprep.subr.bf16.mxu0 0
  %673 = vmatpush1.bf16.msra.mxu0 %v163
  %674 = vmatprep.subr.bf16.mxu0 0
  %675 = vmatpush1.bf16.msra.mxu0 %v164
  %676 = vmatprep.subr.bf16.mxu0 0
  %677 = vmatpush1.bf16.msra.mxu0 0
  %678 = vmatprep.subr.bf16.mxu0 0
  %679 = vmatpush1.bf16.msra.mxu0 0
  %680 = vmatprep.subr.bf16.mxu0 0
  %681 = vmatpush1.bf16.msra.mxu0 0
  %682 = vmatprep.subr.bf16.mxu0 0
  %683 = vmatpush1.bf16.msra.mxu0 0
  %684 = vmatprep.subr.bf16.mxu0 0
  %685 = vmatpush1.bf16.msra.mxu0 0
  %686 = vmatprep.subr.bf16.mxu0 0
  %687 = vmatpush1.bf16.msra.mxu0 0
  %688 = vmatprep.subr.bf16.mxu0 0
  %689 = vmatpush1.bf16.msra.mxu0 0
  %690 = vmatprep.subr.bf16.mxu0 0
  %691 = vmatpush1.bf16.msra.mxu0 0
  %692 = vmatprep.subr.bf16.mxu0 0
  %693 = vmatpush1.bf16.msra.mxu0 0
  %694 = vmatprep.subr.bf16.mxu0 0
  %695 = vmatpush1.bf16.msra.mxu0 0
  %696 = vmatprep.subr.bf16.mxu0 0
  %697 = vmatpush1.bf16.msra.mxu0 0
  %698 = vmatprep.subr.bf16.mxu0 0
  %699 = vmatpush1.bf16.msra.mxu0 0
  %700 = vmatprep.subr.bf16.mxu0 0
  %701 = vmatpush1.bf16.msra.mxu0 0
  %702 = vmatprep.subr.bf16.mxu0 0
  %703 = vmatpush1.bf16.msra.mxu0 0
  %704 = vmatprep.mubr.bf16.mxu0 0
  %705 = vmatmul.mubr.bf16.gmra.mrb[0].mxu0 %v670
  %v706 = vpop.f32.mrb[0].mxu0
  %v707 = vadd.f32 0.0, %v706
  %v708 = vpop.f32.mrb[0].mxu0
  %v709 = vpop.f32.mrb[0].mxu0
  %v710 = vpop.f32.mrb[0].mxu0
  %711 = vdwg.mxu0
  %v712 = vadd.f32 %v145, %v707
  %v713 = vsub.f32 0.0, %v712
  %v714 = vmul.f32 %v713, 1.442695
  %v715 = vpow.pop %v714
  %v716 = vadd.f32 %v715, 1.0
  %v717 = vrcp.pop %v716
  %v718 = vtanh.pop %v712
  %v719 = vmul.f32 %v717, %v658
  %721 = vrot.lane.b32.xlu0 %v718, 32
  %v722 = vpop.permute.xlu0 %721
  %v724 = vmul.f32 %v717, %v722
  %726 = vrot.lane.b32.xlu0 %v724, 32
  %v727 = vpop.permute.xlu0 %726
  %v729 = vadd.f32 %v719, %v727
  %v730 = vtanh.pop %v729
  %732 = vrot.lane.b32.xlu0 %v730, 32
  %v733 = vpop.permute.xlu0 %732
  %v735 = vmul.f32 %v717, %v733
  %v736 = vpack.c.bf16 %v735, %v735
  %v737 = vld [vmem:[%s6] sm:$0xf]
  %v738 = vld [vmem:[%s6 + $0x4] sm:$0xf]
  %v739 = vld [vmem:[%s6 + $0x8] sm:$0xf]
  %v740 = vld [vmem:[%s6 + $0xc] sm:$0xf]
  %v741 = vlaneseq
  %v742 = vshrl.u32 %v741, 7
  %v743 = vsub.s32 0, %v742
  %v744 = vrot.slane %v31, %v743
  %746 = vrot.lane.b32.xlu0 %v736, 64
  %v747 = vpop.permute.xlu0 %746
  %v752 = vunpack.c.l.b16 %v737
  %v753 = vunpack.c.l.b16 %v738
  %v754 = vunpack.c.l.b16 %v739
  %v755 = vunpack.c.l.b16 %v740
  %v756 = vpack.c.b16 %v753, %v752
  %v757 = vpack.c.b16 %v755, %v754
  %v761 = vsel %vm167, %v747, 0
  %763 = vmatprep.subr.bf16.mxu0 0
  %764 = vmatpush1.bf16.msra.mxu0 %v756
  %765 = vmatprep.subr.bf16.mxu0 0
  %766 = vmatpush1.bf16.msra.mxu0 %v757
  %767 = vmatprep.subr.bf16.mxu0 0
  %768 = vmatpush1.bf16.msra.mxu0 0
  %769 = vmatprep.subr.bf16.mxu0 0
  %770 = vmatpush1.bf16.msra.mxu0 0
  %771 = vmatprep.subr.bf16.mxu0 0
  %772 = vmatpush1.bf16.msra.mxu0 0
  %773 = vmatprep.subr.bf16.mxu0 0
  %774 = vmatpush1.bf16.msra.mxu0 0
  %775 = vmatprep.subr.bf16.mxu0 0
  %776 = vmatpush1.bf16.msra.mxu0 0
  %777 = vmatprep.subr.bf16.mxu0 0
  %778 = vmatpush1.bf16.msra.mxu0 0
  %779 = vmatprep.subr.bf16.mxu0 0
  %780 = vmatpush1.bf16.msra.mxu0 0
  %781 = vmatprep.subr.bf16.mxu0 0
  %782 = vmatpush1.bf16.msra.mxu0 0
  %783 = vmatprep.subr.bf16.mxu0 0
  %784 = vmatpush1.bf16.msra.mxu0 0
  %785 = vmatprep.subr.bf16.mxu0 0
  %786 = vmatpush1.bf16.msra.mxu0 0
  %787 = vmatprep.subr.bf16.mxu0 0
  %788 = vmatpush1.bf16.msra.mxu0 0
  %789 = vmatprep.subr.bf16.mxu0 0
  %790 = vmatpush1.bf16.msra.mxu0 0
  %791 = vmatprep.subr.bf16.mxu0 0
  %792 = vmatpush1.bf16.msra.mxu0 0
  %793 = vmatprep.subr.bf16.mxu0 0
  %794 = vmatpush1.bf16.msra.mxu0 0
  %795 = vmatprep.mubr.bf16.mxu0 0
  %796 = vmatmul.mubr.bf16.gmra.mrb[0].mxu0 %v761
  %v797 = vpop.f32.mrb[0].mxu0
  %v798 = vadd.f32 %v744, %v797
  %v799 = vpop.f32.mrb[0].mxu0
  %v800 = vpop.f32.mrb[0].mxu0
  %v801 = vpop.f32.mrb[0].mxu0
  %802 = vdwg.mxu0
  %v803 = vtanh.pop %v798
  %v804 = vpack.c.bf16 %v803, %v803
  %v805 = vld [vmem:[%s7] sm:$0xf]
  %v806 = vld [vmem:[%s7 + $0x4] sm:$0xf]
  %v807 = vld [vmem:[%s7 + $0x8] sm:$0xf]
  %v808 = vld [vmem:[%s7 + $0xc] sm:$0xf]
  %v809 = vld [vmem:[%s7 + $0x10] sm:$0xf]
  %v810 = vld [vmem:[%s7 + $0x14] sm:$0xf]
  %v811 = vld [vmem:[%s7 + $0x18] sm:$0xf]
  %v812 = vld [vmem:[%s7 + $0x1c] sm:$0xf]
  %v813 = vlaneseq
  %v814 = vshrl.u32 %v813, 7
  %v815 = vsub.s32 0, %v814
  %v816 = vrot.slane %v32, %v815
  %v825 = vunpack.c.l.b16 %v805
  %v826 = vunpack.c.l.b16 %v806
  %v827 = vunpack.c.l.b16 %v807
  %v828 = vunpack.c.l.b16 %v808
  %v829 = vunpack.c.l.b16 %v809
  %v830 = vunpack.c.l.b16 %v810
  %v831 = vunpack.c.l.b16 %v811
  %v832 = vunpack.c.l.b16 %v812
  %v833 = vpack.c.b16 %v826, %v825
  %v834 = vpack.c.b16 %v828, %v827
  %v835 = vpack.c.b16 %v830, %v829
  %v836 = vpack.c.b16 %v832, %v831
  %vm841 = vcmask 523264
  %v843 = vsel %vm841, %v804, 0
  %845 = vmatprep.subr.bf16.mxu0 0
  %846 = vmatpush1.bf16.msra.mxu0 %v833
  %847 = vmatprep.subr.bf16.mxu0 0
  %848 = vmatpush1.bf16.msra.mxu0 %v834
  %849 = vmatprep.subr.bf16.mxu0 0
  %850 = vmatpush1.bf16.msra.mxu0 %v835
  %851 = vmatprep.subr.bf16.mxu0 0
  %852 = vmatpush1.bf16.msra.mxu0 %v836
  %853 = vmatprep.subr.bf16.mxu0 0
  %854 = vmatpush1.bf16.msra.mxu0 0
  %855 = vmatprep.subr.bf16.mxu0 0
  %856 = vmatpush1.bf16.msra.mxu0 0
  %857 = vmatprep.subr.bf16.mxu0 0
  %858 = vmatpush1.bf16.msra.mxu0 0
  %859 = vmatprep.subr.bf16.mxu0 0
  %860 = vmatpush1.bf16.msra.mxu0 0
  %861 = vmatprep.subr.bf16.mxu0 0
  %862 = vmatpush1.bf16.msra.mxu0 0
  %863 = vmatprep.subr.bf16.mxu0 0
  %864 = vmatpush1.bf16.msra.mxu0 0
  %865 = vmatprep.subr.bf16.mxu0 0
  %866 = vmatpush1.bf16.msra.mxu0 0
  %867 = vmatprep.subr.bf16.mxu0 0
  %868 = vmatpush1.bf16.msra.mxu0 0
  %869 = vmatprep.subr.bf16.mxu0 0
  %870 = vmatpush1.bf16.msra.mxu0 0
  %871 = vmatprep.subr.bf16.mxu0 0
  %872 = vmatpush1.bf16.msra.mxu0 0
  %873 = vmatprep.subr.bf16.mxu0 0
  %874 = vmatpush1.bf16.msra.mxu0 0
  %875 = vmatprep.subr.bf16.mxu0 0
  %876 = vmatpush1.bf16.msra.mxu0 0
  %877 = vmatprep.mubr.bf16.mxu0 0
  %878 = vmatmul.mubr.bf16.gmra.mrb[0].mxu0 %v843
  %v879 = vpop.f32.mrb[0].mxu0
  %v880 = vadd.f32 %v816, %v879
  %v881 = vpop.f32.mrb[0].mxu0
  %v882 = vpop.f32.mrb[0].mxu0
  %v883 = vpop.f32.mrb[0].mxu0
  %884 = vdwg.mxu0
  %vm885 = vcmask 15360
  %886 = vst.msk [vmem:[%s8] sm:$0xff] %vm885, %v880
  // Predicated region
  $region34: #{lstm_whole_forward.1} parent=0 // pred_check
    _
  $region35: #{lstm_whole_forward.1} parent=0 // pred_check_branch
    %888 = sbr.rel (0) target = $region37
  $region36: #{lstm_whole_forward.1} parent=0 // pred_region
    _
  $region37: #{lstm_whole_forward.1} parent=0 // pred_fallthru
    _
  // Predicated region
  $region38: #{lstm_whole_forward.1} parent=0 // pred_check
    _
  $region39: #{lstm_whole_forward.1} parent=0 // pred_check_branch
    %890 = sbr.rel (0) target = $region41
  $region40: #{lstm_whole_forward.1} parent=0 // pred_region
    _
  $region41: #{lstm_whole_forward.1} parent=0 // pred_fallthru
    _

</llo_original>
